<compile_context>
chip_gen: v5e
topology: v5e:2x2
jax: 0.10.0
libtpu: 0.0.40
codegen_flags: <defaults>
</compile_context>

<pallas_src>
import jax
import jax.numpy as jnp
from jax.experimental import pallas as pl
from jax.experimental.pallas import tpu as pltpu


def _ff_kernel(x_ref, w1_ref, b1_ref, alpha_ref, invbeta_ref,
               w2_ref, b2_ref, o_ref, acc_ref):
    k = pl.program_id(1)

    @pl.when(k == 0)
    def _():
        acc_ref[...] = jnp.zeros_like(acc_ref)

    # ---- chunk of SnakeBeta.proj: (TILE_M, TILE_K) hidden slab, f32 acc ----
    h = jnp.dot(x_ref[...], w1_ref[...],
                preferred_element_type=jnp.float32) + b1_ref[...]

    # ---- SnakeBeta activation (alpha_logscale=True), constants prehoisted --
    s = jnp.sin(h * alpha_ref[...])
    h = h + invbeta_ref[...] * (s * s)

    # Dropout(p=0.0) is identity at inference; nothing to do.

    # ---- accumulate the final Linear over hidden chunks --------------------
    acc_ref[...] += jnp.dot(h.astype(w2_ref.dtype), w2_ref[...],
                            preferred_element_type=jnp.float32)

    @pl.when(k == pl.num_programs(1) - 1)
    def _():
        o_ref[...] = (acc_ref[...] + b2_ref[...]).astype(o_ref.dtype)


def _round_up(a, m):
    return (a + m - 1) // m * m


def feedforward_pallas(x, params, *, tile_m=256, tile_k=512):
    """x: (batch, seq, dim) float32. Returns (batch, seq, dim_out) float32."""
    w1, b1, alpha, beta, w2, b2 = params
    batch, seq, dim = x.shape
    inner = w1.shape[1]
    dim_out = w2.shape[1]
    M = batch * seq

    # Hoist the per-feature activation constants out of the kernel (computed
    # once instead of once per grid step on the EUP).
    exp_alpha = jnp.exp(alpha).astype(jnp.float32)                    # (1, inner)
    inv_beta = (1.0 / (jnp.exp(beta) + 1e-9)).astype(jnp.float32)     # (1, inner)

    # Tile / padding sizes: lane-dense output (multiple of 128), sublane-
    # aligned M tiles, inner dim split into TILE_K reduction chunks.
    tile_m = min(tile_m, _round_up(M, 8))
    m_pad = _round_up(M, tile_m)
    tile_k = min(tile_k, _round_up(inner, 128))
    k_pad = _round_up(inner, tile_k)
    n_pad = _round_up(dim_out, 128)

    x2d = x.reshape(M, dim)
    if m_pad != M:
        x2d = jnp.pad(x2d, ((0, m_pad - M), (0, 0)))

    # bf16 MXU inputs (f32 accumulation inside the kernel). Zero-padding the
    # hidden / output dims is exact: padded hidden features compute to 0 and
    # padded output columns are sliced off below.
    x_bf = x2d.astype(jnp.bfloat16)
    w1_p = jnp.pad(w1, ((0, 0), (0, k_pad - inner))).astype(jnp.bfloat16)
    b1_p = jnp.pad(b1, ((0, 0), (0, k_pad - inner)))
    a_p = jnp.pad(exp_alpha, ((0, 0), (0, k_pad - inner)))
    ib_p = jnp.pad(inv_beta, ((0, 0), (0, k_pad - inner)))
    w2_p = jnp.pad(w2, ((0, k_pad - inner), (0, n_pad - dim_out))).astype(jnp.bfloat16)
    b2_p = jnp.pad(b2, ((0, 0), (0, n_pad - dim_out)))

    grid = (m_pad // tile_m, k_pad // tile_k)

    out = pl.pallas_call(
        _ff_kernel,
        out_shape=jax.ShapeDtypeStruct((m_pad, n_pad), jnp.float32),
        grid_spec=pltpu.PrefetchScalarGridSpec(
            num_scalar_prefetch=0,
            grid=grid,
            in_specs=[
                pl.BlockSpec((tile_m, dim), lambda i, k: (i, 0)),      # x tile
                pl.BlockSpec((dim, tile_k), lambda i, k: (0, k)),      # W1 chunk
                pl.BlockSpec((1, tile_k), lambda i, k: (0, k)),        # b1 chunk
                pl.BlockSpec((1, tile_k), lambda i, k: (0, k)),        # exp(alpha)
                pl.BlockSpec((1, tile_k), lambda i, k: (0, k)),        # 1/(exp(beta)+eps)
                pl.BlockSpec((tile_k, n_pad), lambda i, k: (k, 0)),    # W2 chunk
                pl.BlockSpec((1, n_pad), lambda i, k: (0, 0)),         # b2
            ],
            out_specs=pl.BlockSpec((tile_m, n_pad), lambda i, k: (i, 0)),
            scratch_shapes=[pltpu.VMEM((tile_m, n_pad), jnp.float32)],
        ),
        compiler_params=pltpu.CompilerParams(
            dimension_semantics=("parallel", "arbitrary"),
            vmem_limit_bytes=64 * 1024 * 1024,
        ),
    )(x_bf, w1_p, b1_p, a_p, ib_p, w2_p, b2_p)

    return out[:M, :dim_out].reshape(batch, seq, dim_out)


def init_params(key, dim, inner_dim, dim_out):
    k1, k2, k3, k4 = jax.random.split(key, 4)
    # Linear weights stored already transposed: (in_features, out_features).
    limit1 = 1.0 / jnp.sqrt(dim)
    w1 = jax.random.uniform(k1, (dim, inner_dim), jnp.float32, -limit1, limit1)
    b1 = jax.random.uniform(k2, (1, inner_dim), jnp.float32, -limit1, limit1)
    limit2 = 1.0 / jnp.sqrt(inner_dim)
    w2 = jax.random.uniform(k3, (inner_dim, dim_out), jnp.float32, -limit2, limit2)
    b2 = jax.random.uniform(k4, (1, dim_out), jnp.float32, -limit2, limit2)
    # SnakeBeta: alpha_logscale=True -> alpha, beta init to zeros (exp -> 1).
    alpha = jnp.zeros((1, inner_dim), jnp.float32)
    beta = jnp.zeros((1, inner_dim), jnp.float32)
    return (w1, b1, alpha, beta, w2, b2)


def feedforward_ref(x, params):
    """Pure-JAX f32 reference matching the PyTorch forward."""
    w1, b1, alpha, beta, w2, b2 = params
    h = x @ w1 + b1
    a = jnp.exp(alpha)
    b = jnp.exp(beta)
    h = h + (1.0 / (b + 1e-9)) * jnp.sin(h * a) ** 2
    return h @ w2 + b2


if __name__ == "__main__":
    batch, seq, dim, mult = 2, 8, 32, 4
    inner_dim = dim * mult
    dim_out = dim

    key = jax.random.PRNGKey(0)
    kx, kp = jax.random.split(key)
    x = jax.random.normal(kx, (batch, seq, dim), jnp.float32)
    params = init_params(kp, dim, inner_dim, dim_out)

    out = feedforward_pallas(x, params)
    out = jax.block_until_ready(out)

    ref = feedforward_ref(x, params)
    assert out.shape == (batch, seq, dim_out)
    # bf16 MXU inputs with f32 accumulation -> relaxed tolerance vs f32 ref.
    assert jnp.allclose(out, ref, atol=5e-2, rtol=5e-2), "mismatch vs reference"

    print("KERNEL_OK")
</pallas_src>

<mosaic_0001>
module attributes {stable_mosaic.version = 11 : i64} {
  func.func @_ff_kernel(%arg0: i32, %arg1: i32, %arg2: memref<16x32xbf16, #tpu.memory_space<vmem>>, %arg3: memref<32x128xbf16, #tpu.memory_space<vmem>>, %arg4: memref<1x128xf32, #tpu.memory_space<vmem>>, %arg5: memref<1x128xf32, #tpu.memory_space<vmem>>, %arg6: memref<1x128xf32, #tpu.memory_space<vmem>>, %arg7: memref<128x128xbf16, #tpu.memory_space<vmem>>, %arg8: memref<1x128xf32, #tpu.memory_space<vmem>>, %arg9: memref<16x128xf32, #tpu.memory_space<vmem>>, %arg10: memref<16x128xf32, #tpu.memory_space<vmem>>) attributes {dimension_semantics = [#tpu.dimension_semantics<parallel>, #tpu.dimension_semantics<arbitrary>], iteration_bounds = array<i64: 1, 1>, scalar_prefetch = 0 : i64, scratch_operands = 1 : i64, tpu.core_type = #tpu.core_type<tc>, window_params = [{transform_indices = @transform_0, window_bounds = array<i64: 16, 32>}, {transform_indices = @transform_1, window_bounds = array<i64: 32, 128>}, {transform_indices = @transform_2, window_bounds = array<i64: 1, 128>}, {transform_indices = @transform_3, window_bounds = array<i64: 1, 128>}, {transform_indices = @transform_4, window_bounds = array<i64: 1, 128>}, {transform_indices = @transform_5, window_bounds = array<i64: 128, 128>}, {pipeline_mode = #tpu.pipeline_mode<synchronous>, transform_indices = @transform_6, window_bounds = array<i64: 1, 128>}, {transform_indices = @transform_7, window_bounds = array<i64: 16, 128>}]} {
    %c0_i32 = arith.constant 0 : i32
    %0 = arith.cmpi eq, %arg1, %c0_i32 : i32
    %1 = arith.extui %0 : i1 to i32
    %c0_i32_0 = arith.constant 0 : i32
    %2 = arith.cmpi ne, %1, %c0_i32_0 : i32
    scf.if %2 {
      %cst_19 = arith.constant 0.000000e+00 : f32
      %27 = vector.broadcast %cst_19 : f32 to vector<16x128xf32>
      %c0_20 = arith.constant 0 : index
      %c0_21 = arith.constant 0 : index
      %28 = vector.load %arg10[%c0_20, %c0_21] : memref<16x128xf32, #tpu.memory_space<vmem>>, vector<16x128xf32>
      tpu.vector_store %arg10[%c0_20, %c0_21], %27 {strides = array<i32>} : memref<16x128xf32, #tpu.memory_space<vmem>>, vector<16x128xf32>,
    } else {
    }
    %c0 = arith.constant 0 : index
    %c0_1 = arith.constant 0 : index
    %3 = vector.load %arg2[%c0, %c0_1] : memref<16x32xbf16, #tpu.memory_space<vmem>>, vector<16x32xbf16>
    %c0_2 = arith.constant 0 : index
    %c0_3 = arith.constant 0 : index
    %4 = vector.load %arg3[%c0_2, %c0_3] : memref<32x128xbf16, #tpu.memory_space<vmem>>, vector<32x128xbf16>
    %cst = arith.constant dense<0.000000e+00> : vector<16x128xf32>
    %5 = tpu.matmul %3, %4, %cst {dimension_numbers = #tpu.dot_dimension_numbers<[1], [0], [0], [1], [0, 0, 1, 1], [], []>} : vector<16x32xbf16>, vector<32x128xbf16>, vector<16x128xf32> -> vector<16x128xf32>
    %c0_4 = arith.constant 0 : index
    %c0_5 = arith.constant 0 : index
    %6 = vector.load %arg4[%c0_4, %c0_5] : memref<1x128xf32, #tpu.memory_space<vmem>>, vector<1x128xf32>
    %7 = vector.broadcast %6 : vector<1x128xf32> to vector<16x128xf32>
    %8 = arith.addf %5, %7 : vector<16x128xf32>
    %c0_6 = arith.constant 0 : index
    %c0_7 = arith.constant 0 : index
    %9 = vector.load %arg5[%c0_6, %c0_7] : memref<1x128xf32, #tpu.memory_space<vmem>>, vector<1x128xf32>
    %10 = vector.broadcast %9 : vector<1x128xf32> to vector<16x128xf32>
    %11 = arith.mulf %8, %10 : vector<16x128xf32>
    %12 = math.sin %11 : vector<16x128xf32>
    %c0_8 = arith.constant 0 : index
    %c0_9 = arith.constant 0 : index
    %13 = vector.load %arg6[%c0_8, %c0_9] : memref<1x128xf32, #tpu.memory_space<vmem>>, vector<1x128xf32>
    %14 = arith.mulf %12, %12 : vector<16x128xf32>
    %15 = vector.broadcast %13 : vector<1x128xf32> to vector<16x128xf32>
    %16 = arith.mulf %15, %14 : vector<16x128xf32>
    %17 = arith.addf %8, %16 : vector<16x128xf32>
    %c0_10 = arith.constant 0 : index
    %c0_11 = arith.constant 0 : index
    %18 = vector.load %arg10[%c0_10, %c0_11] : memref<16x128xf32, #tpu.memory_space<vmem>>, vector<16x128xf32>
    %19 = arith.truncf %17 : vector<16x128xf32> to vector<16x128xbf16>
    %c0_12 = arith.constant 0 : index
    %c0_13 = arith.constant 0 : index
    %20 = vector.load %arg7[%c0_12, %c0_13] : memref<128x128xbf16, #tpu.memory_space<vmem>>, vector<128x128xbf16>
    %cst_14 = arith.constant dense<0.000000e+00> : vector<16x128xf32>
    %21 = tpu.matmul %19, %20, %cst_14 {dimension_numbers = #tpu.dot_dimension_numbers<[1], [0], [0], [1], [0, 0, 1, 1], [], []>} : vector<16x128xbf16>, vector<128x128xbf16>, vector<16x128xf32> -> vector<16x128xf32>
    %22 = arith.addf %18, %21 : vector<16x128xf32>
    %c0_15 = arith.constant 0 : index
    %c0_16 = arith.constant 0 : index
    %23 = vector.load %arg10[%c0_15, %c0_16] : memref<16x128xf32, #tpu.memory_space<vmem>>, vector<16x128xf32>
    tpu.vector_store %arg10[%c0_15, %c0_16], %22 {strides = array<i32>} : memref<16x128xf32, #tpu.memory_space<vmem>>, vector<16x128xf32>,
    %c0_i32_17 = arith.constant 0 : i32
    %24 = arith.cmpi eq, %arg1, %c0_i32_17 : i32
    %25 = arith.extui %24 : i1 to i32
    %c0_i32_18 = arith.constant 0 : i32
    %26 = arith.cmpi ne, %25, %c0_i32_18 : i32
    scf.if %26 {
      %c0_19 = arith.constant 0 : index
      %c0_20 = arith.constant 0 : index
      %27 = vector.load %arg10[%c0_19, %c0_20] : memref<16x128xf32, #tpu.memory_space<vmem>>, vector<16x128xf32>
      %c0_21 = arith.constant 0 : index
      %c0_22 = arith.constant 0 : index
      %28 = vector.load %arg8[%c0_21, %c0_22] : memref<1x128xf32, #tpu.memory_space<vmem>>, vector<1x128xf32>
      %29 = vector.broadcast %28 : vector<1x128xf32> to vector<16x128xf32>
      %30 = arith.addf %27, %29 : vector<16x128xf32>
      %c0_23 = arith.constant 0 : index
      %c0_24 = arith.constant 0 : index
      %31 = vector.load %arg9[%c0_23, %c0_24] : memref<16x128xf32, #tpu.memory_space<vmem>>, vector<16x128xf32>
      tpu.vector_store %arg9[%c0_23, %c0_24], %30 {strides = array<i32>} : memref<16x128xf32, #tpu.memory_space<vmem>>, vector<16x128xf32>,
    } else {
    }
    return
  }
  func.func @transform_0(%arg0: i32, %arg1: i32) -> (i32, i32) {
    %c0_i32 = arith.constant 0 : i32
    %c0_i32_0 = arith.constant 0 : i32
    return %arg0, %c0_i32 : i32, i32
  }
  func.func @transform_1(%arg0: i32, %arg1: i32) -> (i32, i32) {
    %c0_i32 = arith.constant 0 : i32
    %c0_i32_0 = arith.constant 0 : i32
    return %c0_i32, %arg1 : i32, i32
  }
  func.func @transform_2(%arg0: i32, %arg1: i32) -> (i32, i32) {
    %c0_i32 = arith.constant 0 : i32
    %c0_i32_0 = arith.constant 0 : i32
    return %c0_i32, %arg1 : i32, i32
  }
  func.func @transform_3(%arg0: i32, %arg1: i32) -> (i32, i32) {
    %c0_i32 = arith.constant 0 : i32
    %c0_i32_0 = arith.constant 0 : i32
    return %c0_i32, %arg1 : i32, i32
  }
  func.func @transform_4(%arg0: i32, %arg1: i32) -> (i32, i32) {
    %c0_i32 = arith.constant 0 : i32
    %c0_i32_0 = arith.constant 0 : i32
    return %c0_i32, %arg1 : i32, i32
  }
  func.func @transform_5(%arg0: i32, %arg1: i32) -> (i32, i32) {
    %c0_i32 = arith.constant 0 : i32
    %c0_i32_0 = arith.constant 0 : i32
    return %arg1, %c0_i32 : i32, i32
  }
  func.func @transform_6(%arg0: i32, %arg1: i32) -> (i32, i32) {
    %c0_i32 = arith.constant 0 : i32
    %c0_i32_0 = arith.constant 0 : i32
    %c0_i32_1 = arith.constant 0 : i32
    return %c0_i32, %c0_i32_0 : i32, i32
  }
  func.func @transform_7(%arg0: i32, %arg1: i32) -> (i32, i32) {
    %c0_i32 = arith.constant 0 : i32
    %c0_i32_0 = arith.constant 0 : i32
    return %arg0, %c0_i32 : i32, i32
  }
}

</mosaic_0001>

<llo_original>
// kernel: tpu_custom_call.1
$region0: #{tpu_custom_call.1}
  #allocation0 [shape = 'u32[]', space=smem, size = 0x4, offset = 0x4, fixed_abs, tag = 'smem constant byte address 0x4 - core index']
  #allocation1 [shape = 'u32[72,128]{1,0:T(1,128)}', space=vmem, size = 0x9000, scoped, tag = 'internal scratch']
  #allocation2 [shape = 'f32[16,128]{1,0:T(8,128)}', space=vmem, size = 0x2000, scoped, tag = 'scratch operand']
  %s0 = inlined_call_operand.hbm [shape: bf16[16,32], index: 0, kind: input, shape index: {}]
  %s1 = inlined_call_operand.hbm [shape: bf16[32,128], index: 1, kind: input, shape index: {}]
  %s2 = inlined_call_operand.vmem [shape: f32[1,128], index: 2, kind: input, shape index: {}]
  %s3 = inlined_call_operand.vmem [shape: f32[1,128], index: 3, kind: input, shape index: {}]
  %s4 = inlined_call_operand.vmem [shape: f32[1,128], index: 4, kind: input, shape index: {}]
  %s5 = inlined_call_operand.hbm [shape: bf16[128,128], index: 5, kind: input, shape index: {}]
  %s6 = inlined_call_operand.vmem [shape: f32[1,128], index: 6, kind: input, shape index: {}]
  %s7 = inlined_call_operand.hbm [shape: f32[16,128], index: 7, kind: output, shape index: {}]
  %s8 = sld [smem:[#allocation0]]
  $region58: #{tpu_custom_call.1} parent=0
    _
  %s10 = ssub.s32 1, %s8
  %s11 = scalar_select 0, %s10, %s8
  $region1: #{tpu_custom_call.1} parent=0
    #allocation3 [shape = 'u8[4096]{0}', space=vmem, size = 0x1000, scoped, tag = 'input window, operand 0, single buffered']
    #allocation4 [shape = 's32[1]{0}', space=sflag, size = 0x4, scoped, tag = 'scoped memory for tpu_custom_call.1']
    #allocation5 [shape = 's32[1]{0}', space=sflag, size = 0x4, scoped, tag = 'scoped memory for tpu_custom_call.1']
    #allocation6 [shape = 'u8[8192]{0}', space=vmem, size = 0x2000, scoped, tag = 'input window, operand 1, single buffered']
    #allocation7 [shape = 's32[1]{0}', space=sflag, size = 0x4, scoped, tag = 'scoped memory for tpu_custom_call.1']
    #allocation8 [shape = 'u8[32768]{0}', space=vmem, size = 0x8000, scoped, tag = 'input window, operand 5, single buffered']
    #allocation9 [shape = 'u8[8192]{0}', space=vmem, size = 0x2000, scoped, tag = 'output window, operand 0, single buffered']
    %12 = vsyncpa [#allocation4], 0
    %13 = vsyncpa [#allocation7], 0
    %14 = vsyncpa [#allocation5], 0
    // Predicated region
    $region2: #{tpu_custom_call.1} parent=1 // pred_check
      _
    $region3: #{tpu_custom_call.1} parent=1 // pred_check_branch
      %16 = sbr.rel (0) target = $region5
    $region4: #{tpu_custom_call.1} parent=1 // pred_region
      %18 = vsyncadd [#allocation4], 0
      %s19 = sshll.u32 %s0, 4
      %s20 = int_to_ptr.hbm [resolvable:$true] %s19
      %s21 = sshll.u32 [#allocation3], 4
      %s22 = int_to_ptr.vmem [resolvable:$true] %s21
      %27 = dma.hbm_to_vmem [thread:$0]  %s20, 128, %s22, [#allocation4], 64, 64, 4
    $region5: #{tpu_custom_call.1} parent=1 // pred_fallthru
      _
    // Predicated region
    $region6: #{tpu_custom_call.1} parent=1 // pred_check
      _
    $region7: #{tpu_custom_call.1} parent=1 // pred_check_branch
      %29 = sbr.rel (0) target = $region9
    $region8: #{tpu_custom_call.1} parent=1 // pred_region
      %31 = vsyncadd [#allocation7], 0
      %s32 = sshll.u32 %s1, 4
      %s33 = int_to_ptr.hbm [resolvable:$true] %s32
      %s34 = sshll.u32 [#allocation6], 4
      %s35 = int_to_ptr.vmem [resolvable:$true] %s34
      %40 = dma.hbm_to_vmem [thread:$0]  %s33, 256, %s35, [#allocation7], 64, 64, 4
    $region9: #{tpu_custom_call.1} parent=1 // pred_fallthru
      _
    // Predicated region
    $region10: #{tpu_custom_call.1} parent=1 // pred_check
      _
    $region11: #{tpu_custom_call.1} parent=1 // pred_check_branch
      %42 = sbr.rel (0) target = $region13
    $region12: #{tpu_custom_call.1} parent=1 // pred_region
      _
    $region13: #{tpu_custom_call.1} parent=1 // pred_fallthru
      _
    // Predicated region
    $region14: #{tpu_custom_call.1} parent=1 // pred_check
      _
    $region15: #{tpu_custom_call.1} parent=1 // pred_check_branch
      %44 = sbr.rel (0) target = $region17
    $region16: #{tpu_custom_call.1} parent=1 // pred_region
      _
    $region17: #{tpu_custom_call.1} parent=1 // pred_fallthru
      _
    // Predicated region
    $region18: #{tpu_custom_call.1} parent=1 // pred_check
      _
    $region19: #{tpu_custom_call.1} parent=1 // pred_check_branch
      %46 = sbr.rel (0) target = $region21
    $region20: #{tpu_custom_call.1} parent=1 // pred_region
      _
    $region21: #{tpu_custom_call.1} parent=1 // pred_fallthru
      _
    // Predicated region
    $region22: #{tpu_custom_call.1} parent=1 // pred_check
      _
    $region23: #{tpu_custom_call.1} parent=1 // pred_check_branch
      %48 = sbr.rel (0) target = $region25
    $region24: #{tpu_custom_call.1} parent=1 // pred_region
      %50 = vsyncadd [#allocation7], 0
      %s51 = sshll.u32 %s5, 4
      %s52 = int_to_ptr.hbm [resolvable:$true] %s51
      %s53 = sshll.u32 [#allocation8], 4
      %s54 = int_to_ptr.vmem [resolvable:$true] %s53
      %59 = dma.hbm_to_vmem [thread:$0]  %s52, 1024, %s54, [#allocation7], 64, 64, 4
    $region25: #{tpu_custom_call.1} parent=1 // pred_fallthru
      _
    // Predicated region
    $region26: #{tpu_custom_call.1} parent=1 // pred_check
      _
    $region27: #{tpu_custom_call.1} parent=1 // pred_check_branch
      %61 = sbr.rel (0) target = $region29
    $region28: #{tpu_custom_call.1} parent=1 // pred_region
      _
    $region29: #{tpu_custom_call.1} parent=1 // pred_fallthru
      _
    // Predicated region
    $region30: #{tpu_custom_call.1} parent=1 // pred_check
      _
    $region31: #{tpu_custom_call.1} parent=1 // pred_check_branch
      %63 = sbr.rel (0) target = $region33
    $region32: #{tpu_custom_call.1} parent=1 // pred_region
      %65 = dma.done [#allocation4], 128
    $region33: #{tpu_custom_call.1} parent=1 // pred_fallthru
      _
    // Predicated region
    $region34: #{tpu_custom_call.1} parent=1 // pred_check
      _
    $region35: #{tpu_custom_call.1} parent=1 // pred_check_branch
      %67 = sbr.rel (0) target = $region37
    $region36: #{tpu_custom_call.1} parent=1 // pred_region
      %69 = dma.done [#allocation7], 256
    $region37: #{tpu_custom_call.1} parent=1 // pred_fallthru
      _
    // Predicated region
    $region38: #{tpu_custom_call.1} parent=1 // pred_check
      _
    $region39: #{tpu_custom_call.1} parent=1 // pred_check_branch
      %71 = sbr.rel (0) target = $region41
    $region40: #{tpu_custom_call.1} parent=1 // pred_region
      %73 = dma.done [#allocation7], 1024
    $region41: #{tpu_custom_call.1} parent=1 // pred_fallthru
      _
    %p75 = scmp.eq.s32.totalorder 0, 0
    // Predicated region
    $region42: #{tpu_custom_call.1} parent=1 // pred_check
      %p76 = pneg %p75
    $region43: #{tpu_custom_call.1} parent=1 // pred_check_branch
      %78 = sbr.rel (%p76) target = $region45
    $region44: #{tpu_custom_call.1} parent=1 // pred_region
      %79 = vst [vmem:[#allocation2] sm:$0xff] 0.0
      %80 = vst [vmem:[#allocation2 + $0x8] sm:$0xff] 0.0
    $region45: #{tpu_custom_call.1} parent=1 // pred_fallthru
      _
    %v81 = vld [vmem:[#allocation3] sm:$0xf]
    %v82 = vld [vmem:[#allocation3 + $0x4] sm:$0xf]
    %v83 = vld [vmem:[#allocation6] sm:$0xf]
    %v84 = vld [vmem:[#allocation6 + $0x4] sm:$0xf]
    %v85 = vld [vmem:[#allocation6 + $0x8] sm:$0xf]
    %v86 = vld [vmem:[#allocation6 + $0xc] sm:$0xf]
    %v87 = vld [vmem:[%s2] sm:$0x1]
    %v89 = vperm.slane %v87, 0
    %v93 = vunpack.c.l.b16 %v81
    %v94 = vunpack.c.l.b16 %v82
    %v95 = vpack.c.b16 %v94, %v93
    %v100 = vunpack.c.l.b16 %v83
    %v101 = vunpack.c.l.b16 %v84
    %v102 = vunpack.c.l.b16 %v85
    %v103 = vunpack.c.l.b16 %v86
    %v104 = vpack.c.b16 %v101, %v100
    %v105 = vpack.c.b16 %v103, %v102
    %vm108 = vcmask 261120
    %v110 = vsel %vm108, %v95, 0
    %112 = vmatpush.bf16.msra.mxu0 0
    %113 = vmatpush.bf16.msra.mxu0 0
    %114 = vmatpush.bf16.msra.mxu0 0
    %115 = vmatpush.bf16.msra.mxu0 0
    %116 = vmatpush.bf16.msra.mxu0 0
    %117 = vmatpush.bf16.msra.mxu0 0
    %118 = vmatpush.bf16.msra.mxu0 %v105
    %119 = vmatpush.bf16.msra.mxu0 %v104
    %120 = vmatmul.bf16.gmra.mxu0 %v110
    %v121 = vpop.f32.mrf.mxu0
    %v122 = vadd.f32 %v89, %v121
    %v123 = vpop.f32.mrf.mxu0
    %v124 = vadd.f32 %v89, %v123
    %125 = vdwg.mxu0
    %v126 = vld [vmem:[%s3] sm:$0x1]
    %v128 = vperm.slane %v126, 0
    %v130 = vmul.f32 %v122, %v128
    %v131 = vmul.f32 %v124, %v128
    %v132 = vand.u32 2147483647, %v130
    %vm133 = vcmp.le.f32.partialorder %v132, 0.7853982
    %vm134 = vcmp.lt.s32.totalorder %v130, 0
    %v135 = vand.u32 %v130, 2139095040
    %v136 = vshrl.u32 %v135, 23
    %v137 = vsub.s32 %v136, 127
    %v138 = vand.u32 2147483647, %v130
    %v139 = vand.u32 %v138, 8388607
    %v140 = vor.u32 %v139, 8388608
    %v141 = vsub.s32 0, %v140
    %v142 = vadd.s32 %v137, 1
    %vm143 = vcmp.gt.s32.totalorder %v142, 0
    %v144 = vsel %vm143, %v142, 0
    %v145 = vshrl.u32 %v144, 5
    %v146 = vand.u32 %v144, 31
    %v147 = vsub.s32 32, %v146
    %v148 = vshrl.u32 683565275, %v147
    %v149 = vshll.u32 683565275, %v146
    %v150 = vshrl.u32 2475754826, %v147
    %v151 = vor.u32 %v149, %v150
    %v152 = vshll.u32 2475754826, %v146
    %v153 = vshrl.u32 2131351028, %v147
    %v154 = vor.u32 %v152, %v153
    %v155 = vshll.u32 2131351028, %v146
    %v156 = vshrl.u32 2102212464, %v147
    %v157 = vor.u32 %v155, %v156
    %v158 = vshll.u32 2102212464, %v146
    %v159 = vshrl.u32 920167782, %v147
    %v160 = vor.u32 %v158, %v159
    %v161 = vshll.u32 920167782, %v146
    %v162 = vshrl.u32 1326507024, %v147
    %v163 = vor.u32 %v161, %v162
    %vm164 = vcmp.lt.s32.totalorder %v145, 1
    %vm165 = vcmp.lt.s32.totalorder %v145, 2
    %vm166 = vcmp.lt.s32.totalorder %v145, 3
    %vm167 = vcmp.lt.s32.totalorder %v145, 4
    %v168 = vsel %vm164, %v148, %v151
    %v169 = vsel %vm167, %v157, 2102212464
    %v170 = vsel %vm166, %v154, %v169
    %v171 = vsel %vm165, %v168, %v170
    %v172 = vsel %vm164, %v151, %v154
    %v173 = vsel %vm167, %v160, 920167782
    %v174 = vsel %vm166, %v157, %v173
    %v175 = vsel %vm165, %v172, %v174
    %v176 = vsel %vm164, %v154, %v157
    %v177 = vsel %vm167, %v163, 1326507024
    %v178 = vsel %vm166, %v160, %v177
    %v179 = vsel %vm165, %v176, %v178
    %v180 = vshll.u32 %v140, 8
    %v181 = vand.u32 %v180, 65535
    %v182 = vshrl.u32 %v180, 16
    %v183 = vand.u32 %v179, 65535
    %v184 = vshrl.u32 %v179, 16
    %v185 = vmul.u32 %v181, %v183
    %v186 = vmul.u32 %v181, %v184
    %v187 = vmul.u32 %v182, %v183
    %v188 = vmul.u32 %v182, %v184
    %v189 = vshll.u32 %v186, 16
    %v190 = vshrl.u32 %v186, 16
    %v191 = vshll.u32 %v187, 16
    %v192 = vshrl.u32 %v187, 16
    %vm193 = vc.u32 %v185, %v189
    %v194 = vsel %vm193, 1, 0
    %v195 = vadd.s32 %v185, %v189
    %v196 = vadd.s32 %v188, %v194
    %vm197 = vc.u32 %v195, %v191
    %v198 = vsel %vm197, 1, 0
    %v199 = vadd.s32 %v195, %v191
    %v200 = vadd.s32 %v196, %v198
    %v201 = vadd.s32 %v200, %v190
    %v202 = vadd.s32 %v201, %v192
    %v203 = vand.u32 %v180, 65535
    %v204 = vshrl.u32 %v180, 16
    %v205 = vand.u32 %v175, 65535
    %v206 = vshrl.u32 %v175, 16
    %v207 = vmul.u32 %v203, %v205
    %v208 = vmul.u32 %v203, %v206
    %v209 = vmul.u32 %v204, %v205
    %v210 = vmul.u32 %v204, %v206
    %v211 = vshll.u32 %v208, 16
    %v212 = vshrl.u32 %v208, 16
    %v213 = vshll.u32 %v209, 16
    %v214 = vshrl.u32 %v209, 16
    %vm215 = vc.u32 %v207, %v211
    %v216 = vsel %vm215, 1, 0
    %v217 = vadd.s32 %v207, %v211
    %v218 = vadd.s32 %v210, %v216
    %vm219 = vc.u32 %v217, %v213
    %v220 = vsel %vm219, 1, 0
    %v221 = vadd.s32 %v217, %v213
    %v222 = vadd.s32 %v218, %v220
    %v223 = vadd.s32 %v222, %v212
    %v224 = vadd.s32 %v223, %v214
    %v225 = vmul.u32 %v180, %v171
    %v226 = vadd.s32 %v202, %v221
    %vm227 = vc.u32 %v202, %v221
    %v228 = vadd.s32 %v224, 1
    %v229 = vsel %vm227, %v228, %v224
    %v230 = vadd.s32 %v225, %v229
    %v231 = vadd.s32 %v230, 536870912
    %v232 = vshrl.u32 %v231, 30
    %v233 = vshll.u32 %v232, 30
    %v234 = vsub.s32 %v230, %v233
    %vm235 = vcmp.lt.s32.totalorder %v234, 0
    %v236 = vsub.s32 0, %v234
    %v237 = vsel %vm235, %v236, %v234
    %v238 = vclz %v237
    %v239 = vsub.s32 %v238, 2
    %vm240 = vcmp.gt.s32.totalorder 0, %v239
    %v241 = vsel %vm240, 0, %v239
    %v242 = vsub.s32 32, %v241
    %v243 = vshll.u32 %v234, %v241
    %v244 = vshrl.u32 %v226, %v242
    %v245 = vor.u32 %v243, %v244
    %v246 = vsub.s32 4294967266, %v241
    %v247 = vadd.s32 %v246, 127
    %v248 = vshll.u32 %v247, 23
    %v249 = vor.u32 4788187, %v248
    %v250 = vand.u32 2147483647, %v249
    %v252 = vcvt.s32.f32 %v245
    %v253 = vmul.f32 %v252, %v250
    %v254 = vxor.u32 %v253, 2147483648
    %v255 = vsel %vm134, %v254, %v253
    %v256 = vsub.s32 4, %v232
    %v257 = vsel %vm134, %v256, %v232
    %v258 = vsel %vm133, %v130, %v255
    %v259 = vsel %vm133, 0, %v257
    %v260 = vmul.f32 %v258, %v258
    %v261 = vmul.f32 %v260, -0.001358992
    %v262 = vadd.f32 %v261, 0.041655596
    %v263 = vmul.f32 %v260, %v262
    %v264 = vadd.f32 %v263, -0.4999988
    %v265 = vmul.f32 %v260, %v264
    %v266 = vadd.f32 1.0, %v265
    %v267 = vmul.f32 %v258, %v258
    %v268 = vmul.f32 %v267, -0.00019511016
    %v269 = vadd.f32 %v268, 0.008332121
    %v270 = vmul.f32 %v267, %v269
    %v271 = vadd.f32 %v270, -0.16666654
    %v272 = vmul.f32 %v267, %v271
    %v273 = vadd.f32 %v272, 1.0
    %v274 = vmul.f32 %v273, %v258
    %vm275 = vweird.f32 %v130
    %v276 = vadd.s32 %v259, 3
    %v277 = vand.u32 %v276, 3
    %vm278 = vcmp.lt.s32.totalorder %v277, 2
    %vm279 = vcmp.eq.s32.totalorder %v277, 0
    %v280 = vxor.u32 %v274, 2147483648
    %v281 = vsel %vm279, %v266, %v280
    %vm282 = vcmp.eq.s32.totalorder %v277, 2
    %v283 = vxor.u32 %v266, 2147483648
    %v284 = vsel %vm282, %v283, %v274
    %v285 = vsel %vm278, %v281, %v284
    %v286 = vsel %vm275, nan, %v285
    %v287 = vand.u32 2147483647, %v131
    %vm288 = vcmp.le.f32.partialorder %v287, 0.7853982
    %vm289 = vcmp.lt.s32.totalorder %v131, 0
    %v290 = vand.u32 %v131, 2139095040
    %v291 = vshrl.u32 %v290, 23
    %v292 = vsub.s32 %v291, 127
    %v293 = vand.u32 2147483647, %v131
    %v294 = vand.u32 %v293, 8388607
    %v295 = vor.u32 %v294, 8388608
    %v296 = vsub.s32 0, %v295
    %v297 = vadd.s32 %v292, 1
    %vm298 = vcmp.gt.s32.totalorder %v297, 0
    %v299 = vsel %vm298, %v297, 0
    %v300 = vshrl.u32 %v299, 5
    %v301 = vand.u32 %v299, 31
    %v302 = vsub.s32 32, %v301
    %v303 = vshrl.u32 683565275, %v302
    %v304 = vshll.u32 683565275, %v301
    %v305 = vshrl.u32 2475754826, %v302
    %v306 = vor.u32 %v304, %v305
    %v307 = vshll.u32 2475754826, %v301
    %v308 = vshrl.u32 2131351028, %v302
    %v309 = vor.u32 %v307, %v308
    %v310 = vshll.u32 2131351028, %v301
    %v311 = vshrl.u32 2102212464, %v302
    %v312 = vor.u32 %v310, %v311
    %v313 = vshll.u32 2102212464, %v301
    %v314 = vshrl.u32 920167782, %v302
    %v315 = vor.u32 %v313, %v314
    %v316 = vshll.u32 920167782, %v301
    %v317 = vshrl.u32 1326507024, %v302
    %v318 = vor.u32 %v316, %v317
    %vm319 = vcmp.lt.s32.totalorder %v300, 1
    %vm320 = vcmp.lt.s32.totalorder %v300, 2
    %vm321 = vcmp.lt.s32.totalorder %v300, 3
    %vm322 = vcmp.lt.s32.totalorder %v300, 4
    %v323 = vsel %vm319, %v303, %v306
    %v324 = vsel %vm322, %v312, 2102212464
    %v325 = vsel %vm321, %v309, %v324
    %v326 = vsel %vm320, %v323, %v325
    %v327 = vsel %vm319, %v306, %v309
    %v328 = vsel %vm322, %v315, 920167782
    %v329 = vsel %vm321, %v312, %v328
    %v330 = vsel %vm320, %v327, %v329
    %v331 = vsel %vm319, %v309, %v312
    %v332 = vsel %vm322, %v318, 1326507024
    %v333 = vsel %vm321, %v315, %v332
    %v334 = vsel %vm320, %v331, %v333
    %v335 = vshll.u32 %v295, 8
    %v336 = vand.u32 %v335, 65535
    %v337 = vshrl.u32 %v335, 16
    %v338 = vand.u32 %v334, 65535
    %v339 = vshrl.u32 %v334, 16
    %v340 = vmul.u32 %v336, %v338
    %v341 = vmul.u32 %v336, %v339
    %v342 = vmul.u32 %v337, %v338
    %v343 = vmul.u32 %v337, %v339
    %v344 = vshll.u32 %v341, 16
    %v345 = vshrl.u32 %v341, 16
    %v346 = vshll.u32 %v342, 16
    %v347 = vshrl.u32 %v342, 16
    %vm348 = vc.u32 %v340, %v344
    %v349 = vsel %vm348, 1, 0
    %v350 = vadd.s32 %v340, %v344
    %v351 = vadd.s32 %v343, %v349
    %vm352 = vc.u32 %v350, %v346
    %v353 = vsel %vm352, 1, 0
    %v354 = vadd.s32 %v350, %v346
    %v355 = vadd.s32 %v351, %v353
    %v356 = vadd.s32 %v355, %v345
    %v357 = vadd.s32 %v356, %v347
    %v358 = vand.u32 %v335, 65535
    %v359 = vshrl.u32 %v335, 16
    %v360 = vand.u32 %v330, 65535
    %v361 = vshrl.u32 %v330, 16
    %v362 = vmul.u32 %v358, %v360
    %v363 = vmul.u32 %v358, %v361
    %v364 = vmul.u32 %v359, %v360
    %v365 = vmul.u32 %v359, %v361
    %v366 = vshll.u32 %v363, 16
    %v367 = vshrl.u32 %v363, 16
    %v368 = vshll.u32 %v364, 16
    %v369 = vshrl.u32 %v364, 16
    %vm370 = vc.u32 %v362, %v366
    %v371 = vsel %vm370, 1, 0
    %v372 = vadd.s32 %v362, %v366
    %v373 = vadd.s32 %v365, %v371
    %vm374 = vc.u32 %v372, %v368
    %v375 = vsel %vm374, 1, 0
    %v376 = vadd.s32 %v372, %v368
    %v377 = vadd.s32 %v373, %v375
    %v378 = vadd.s32 %v377, %v367
    %v379 = vadd.s32 %v378, %v369
    %v380 = vmul.u32 %v335, %v326
    %v381 = vadd.s32 %v357, %v376
    %vm382 = vc.u32 %v357, %v376
    %v383 = vadd.s32 %v379, 1
    %v384 = vsel %vm382, %v383, %v379
    %v385 = vadd.s32 %v380, %v384
    %v386 = vadd.s32 %v385, 536870912
    %v387 = vshrl.u32 %v386, 30
    %v388 = vshll.u32 %v387, 30
    %v389 = vsub.s32 %v385, %v388
    %vm390 = vcmp.lt.s32.totalorder %v389, 0
    %v391 = vsub.s32 0, %v389
    %v392 = vsel %vm390, %v391, %v389
    %v393 = vclz %v392
    %v394 = vsub.s32 %v393, 2
    %vm395 = vcmp.gt.s32.totalorder 0, %v394
    %v396 = vsel %vm395, 0, %v394
    %v397 = vsub.s32 32, %v396
    %v398 = vshll.u32 %v389, %v396
    %v399 = vshrl.u32 %v381, %v397
    %v400 = vor.u32 %v398, %v399
    %v401 = vsub.s32 4294967266, %v396
    %v402 = vadd.s32 %v401, 127
    %v403 = vshll.u32 %v402, 23
    %v404 = vor.u32 4788187, %v403
    %v405 = vand.u32 2147483647, %v404
    %v407 = vcvt.s32.f32 %v400
    %v408 = vmul.f32 %v407, %v405
    %v409 = vxor.u32 %v408, 2147483648
    %v410 = vsel %vm289, %v409, %v408
    %v411 = vsub.s32 4, %v387
    %v412 = vsel %vm289, %v411, %v387
    %v413 = vsel %vm288, %v131, %v410
    %v414 = vsel %vm288, 0, %v412
    %v415 = vmul.f32 %v413, %v413
    %v416 = vmul.f32 %v415, -0.001358992
    %v417 = vadd.f32 %v416, 0.041655596
    %v418 = vmul.f32 %v415, %v417
    %v419 = vadd.f32 %v418, -0.4999988
    %v420 = vmul.f32 %v415, %v419
    %v421 = vadd.f32 1.0, %v420
    %v422 = vmul.f32 %v413, %v413
    %v423 = vmul.f32 %v422, -0.00019511016
    %v424 = vadd.f32 %v423, 0.008332121
    %v425 = vmul.f32 %v422, %v424
    %v426 = vadd.f32 %v425, -0.16666654
    %v427 = vmul.f32 %v422, %v426
    %v428 = vadd.f32 %v427, 1.0
    %v429 = vmul.f32 %v428, %v413
    %vm430 = vweird.f32 %v131
    %v431 = vadd.s32 %v414, 3
    %v432 = vand.u32 %v431, 3
    %vm433 = vcmp.lt.s32.totalorder %v432, 2
    %vm434 = vcmp.eq.s32.totalorder %v432, 0
    %v435 = vxor.u32 %v429, 2147483648
    %v436 = vsel %vm434, %v421, %v435
    %vm437 = vcmp.eq.s32.totalorder %v432, 2
    %v438 = vxor.u32 %v421, 2147483648
    %v439 = vsel %vm437, %v438, %v429
    %v440 = vsel %vm433, %v436, %v439
    %v441 = vsel %vm430, nan, %v440
    %v442 = vld [vmem:[%s4] sm:$0x1]
    %v443 = vmul.f32 %v286, %v286
    %v444 = vmul.f32 %v441, %v441
    %v446 = vperm.slane %v442, 0
    %v448 = vmul.f32 %v446, %v443
    %v449 = vmul.f32 %v446, %v444
    %v450 = vadd.f32 %v122, %v448
    %v451 = vadd.f32 %v124, %v449
    %v452 = vld [vmem:[#allocation2] sm:$0xff]
    %v453 = vld [vmem:[#allocation2 + $0x8] sm:$0xff]
    %v454 = vpack.c.bf16 %v451, %v450
    %v455 = vld [vmem:[#allocation8] sm:$0xf]
    %v456 = vld [vmem:[#allocation8 + $0x4] sm:$0xf]
    %v457 = vld [vmem:[#allocation8 + $0x8] sm:$0xf]
    %v458 = vld [vmem:[#allocation8 + $0xc] sm:$0xf]
    %v459 = vld [vmem:[#allocation8 + $0x10] sm:$0xf]
    %v460 = vld [vmem:[#allocation8 + $0x14] sm:$0xf]
    %v461 = vld [vmem:[#allocation8 + $0x18] sm:$0xf]
    %v462 = vld [vmem:[#allocation8 + $0x1c] sm:$0xf]
    %v463 = vld [vmem:[#allocation8 + $0x20] sm:$0xf]
    %v464 = vld [vmem:[#allocation8 + $0x24] sm:$0xf]
    %v465 = vld [vmem:[#allocation8 + $0x28] sm:$0xf]
    %v466 = vld [vmem:[#allocation8 + $0x2c] sm:$0xf]
    %v467 = vld [vmem:[#allocation8 + $0x30] sm:$0xf]
    %v468 = vld [vmem:[#allocation8 + $0x34] sm:$0xf]
    %v469 = vld [vmem:[#allocation8 + $0x38] sm:$0xf]
    %v470 = vld [vmem:[#allocation8 + $0x3c] sm:$0xf]
    %v487 = vunpack.c.l.b16 %v455
    %v488 = vunpack.c.l.b16 %v456
    %v489 = vunpack.c.l.b16 %v457
    %v490 = vunpack.c.l.b16 %v458
    %v491 = vunpack.c.l.b16 %v459
    %v492 = vunpack.c.l.b16 %v460
    %v493 = vunpack.c.l.b16 %v461
    %v494 = vunpack.c.l.b16 %v462
    %v495 = vunpack.c.l.b16 %v463
    %v496 = vunpack.c.l.b16 %v464
    %v497 = vunpack.c.l.b16 %v465
    %v498 = vunpack.c.l.b16 %v466
    %v499 = vunpack.c.l.b16 %v467
    %v500 = vunpack.c.l.b16 %v468
    %v501 = vunpack.c.l.b16 %v469
    %v502 = vunpack.c.l.b16 %v470
    %v503 = vpack.c.b16 %v488, %v487
    %v504 = vpack.c.b16 %v490, %v489
    %v505 = vpack.c.b16 %v492, %v491
    %v506 = vpack.c.b16 %v494, %v493
    %v507 = vpack.c.b16 %v496, %v495
    %v508 = vpack.c.b16 %v498, %v497
    %v509 = vpack.c.b16 %v500, %v499
    %v510 = vpack.c.b16 %v502, %v501
    %519 = vmatpush.bf16.msra.mxu0 %v510
    %520 = vmatpush.bf16.msra.mxu0 %v509
    %521 = vmatpush.bf16.msra.mxu0 %v508
    %522 = vmatpush.bf16.msra.mxu0 %v507
    %523 = vmatpush.bf16.msra.mxu0 %v506
    %524 = vmatpush.bf16.msra.mxu0 %v505
    %525 = vmatpush.bf16.msra.mxu0 %v504
    %526 = vmatpush.bf16.msra.mxu0 %v503
    %527 = vmatmul.bf16.gmra.mxu0 %v454
    %v528 = vpop.f32.mrf.mxu0
    %v529 = vadd.f32 0.0, %v528
    %v530 = vpop.f32.mrf.mxu0
    %v531 = vadd.f32 0.0, %v530
    %532 = vdwg.mxu0
    %v533 = vadd.f32 %v452, %v529
    %v534 = vadd.f32 %v453, %v531
    %535 = vst [vmem:[#allocation2] sm:$0xff] %v533
    %536 = vst [vmem:[#allocation2 + $0x8] sm:$0xff] %v534
    // Predicated region
    $region46: #{tpu_custom_call.1} parent=1 // pred_check
      %p537 = pneg %p75
    $region47: #{tpu_custom_call.1} parent=1 // pred_check_branch
      %539 = sbr.rel (%p537) target = $region49
    $region48: #{tpu_custom_call.1} parent=1 // pred_region
      %v540 = vld [vmem:[#allocation2] sm:$0xff]
      %v541 = vld [vmem:[#allocation2 + $0x8] sm:$0xff]
      %v542 = vld [vmem:[%s6] sm:$0x1]
      %v544 = vperm.slane %v542, 0
      %v546 = vadd.f32 %v540, %v544
      %v547 = vadd.f32 %v541, %v544
      %548 = vst [vmem:[#allocation9] sm:$0xff] %v546
      %549 = vst [vmem:[#allocation9 + $0x8] sm:$0xff] %v547
    $region49: #{tpu_custom_call.1} parent=1 // pred_fallthru
      _
    // Predicated region
    $region50: #{tpu_custom_call.1} parent=1 // pred_check
      _
    $region51: #{tpu_custom_call.1} parent=1 // pred_check_branch
      %551 = sbr.rel (0) target = $region53
    $region52: #{tpu_custom_call.1} parent=1 // pred_region
      %553 = vsyncadd [#allocation5], 0
      %s554 = sshll.u32 [#allocation9], 4
      %s555 = int_to_ptr.vmem [resolvable:$true] %s554
      %s556 = sshll.u32 %s7, 4
      %s557 = int_to_ptr.hbm [resolvable:$true] %s556
      %562 = dma.vmem_to_hbm [thread:$0]  %s555, 256, %s557, [#allocation5], 128, 128, 8
    $region53: #{tpu_custom_call.1} parent=1 // pred_fallthru
      _
    // Predicated region
    $region54: #{tpu_custom_call.1} parent=1 // pred_check
      _
    $region55: #{tpu_custom_call.1} parent=1 // pred_check_branch
      %564 = sbr.rel (0) target = $region57
    $region56: #{tpu_custom_call.1} parent=1 // pred_region
      %566 = dma.done [#allocation5], 256
    $region57: #{tpu_custom_call.1} parent=1 // pred_fallthru
      _
    %567 = vsyncpa [#allocation4], 1
    %568 = vsyncpa [#allocation7], 1
    %569 = vsyncpa [#allocation5], 1

</llo_original>
